<compile_context>
chip_gen: v5e
topology: v5e:2x2
jax: 0.10.0
libtpu: 0.0.40
codegen_flags: <defaults>
</compile_context>

<pallas_src>
import jax
import jax.numpy as jnp
from jax.experimental import pallas as pl
from jax.experimental.pallas import tpu as pltpu


# ---------------------------------------------------------------------------
# Sizes (consistent with the module's constructor semantics)
# ---------------------------------------------------------------------------
BATCH = 16         # total rows processed per call (multiple of ROWS)
ROWS = 16          # rows per grid step (whole batch -> single grid step)
STATE = 4          # policy_state_size == posterior_state_size
HISTORY = 1        # history_size
POST_ACTION = 4    # posterior_action_size
LATENT = 8         # policy_latent_size == posterior_latent_size
ACTION_OUT = 4     # policy_output_size
HIDDEN = 32        # hidden_size
GOAL = 2           # posterior_goal_size (g unused in the implemented branch)

DX = STATE * HISTORY                   # x feature dim
DC = POST_ACTION + LATENT              # c feature dim (cat(x,c) matches posterior input)

# NOTE: the policy consumes x[:, -STATE:]; with HISTORY == 1 that is all of x.
assert HISTORY == 1, "kernel feeds full x into the policy; only valid for history_size=1"


def _align8(n):
    return ((n + 7) // 8) * 8


# --- packed input layout: [x(4) | c(12) | 1.0 | zeros(7)] --------------------
XIN_BIAS_COL = DX + DC                 # 16 (constant-1 column -> folds layer-1 biases)
XIN_W = _align8(DX + DC + 1)           # 24

# --- packed weight-slab row layout (all block starts multiples of 8) ---------
R_QW1 = 0                              # posterior L1 (+ bias row)          24 rows
R_PX1 = R_QW1 + XIN_W                  # policy L1, x half (+ fused bias)   24 rows
R_QW2 = R_PX1 + XIN_W                  # posterior L2                       32 rows
R_QHEAD = R_QW2 + HIDDEN               # posterior head: mu|lv cols 0:16    32 rows
R_MZ = R_QHEAD + HIDDEN                # composed z path  W_mu @ W_p1z      32 rows
R_PW2 = R_MZ + HIDDEN                  # policy L2                          32 rows
R_PAM = R_PW2 + HIDDEN                 # policy action head: cols 16:20     32 rows
W_ROWS = R_PAM + HIDDEN                # 208
W_COLS = HIDDEN                        # 32

# pre-broadcast bias slab: rows [0:R)=q_b2, [R:2R)=p_b2, [2R:3R)=fused head biases
B_ROWS = 3 * ROWS

# output slab layout: [mu(8) | logvar(8) | action_mean(4) | zeros(12)]
COL_MU = 0
COL_LV = LATENT
COL_AM = 2 * LATENT
OUT_W = HIDDEN                         # 32


# ---------------------------------------------------------------------------
# Fused VAE forward kernel (one grid step = whole batch)
# ---------------------------------------------------------------------------
def vae_fused_kernel(xin_ref, w_ref, b_ref, out_ref):
    f32 = jnp.float32
    xin = xin_ref[...]                                            # (ROWS, 24)

    # ---- Policy layer-1, x half (p_b1 and the composed z-bias folded via the
    #      constant-1 column).  Independent of the posterior -> overlaps it. ----
    hp_x = jnp.dot(xin, w_ref[R_PX1:R_PX1 + XIN_W, :], preferred_element_type=f32)

    # ---- Posterior: tanh(L1) -> tanh(L2) -> fused (mu|logvar) head ----
    h = jnp.tanh(
        jnp.dot(xin, w_ref[R_QW1:R_QW1 + XIN_W, :], preferred_element_type=f32))
    h = jnp.tanh(
        jnp.dot(h, w_ref[R_QW2:R_QW2 + HIDDEN, :], preferred_element_type=f32)
        + b_ref[0:ROWS, :])
    # head (pre-bias): cols 0:8 = mu, cols 8:16 = logvar, cols 16:32 = 0
    head = jnp.dot(h, w_ref[R_QHEAD:R_QHEAD + HIDDEN, :], preferred_element_type=f32)

    # ---- reparameterize (eval mode): z = mu.  Its contribution to policy L1 is the
    #      host-precomposed matmul h @ (W_mu @ W_p1z); the matching bias term is
    #      already folded into hp_x, so this runs in parallel with the head. ----
    # TODO(synk): training-mode sampling (eps * exp(0.5*logvar) + mu) would use
    #             pltpu.prng_seed / pltpu.stateful_normal; eval semantics only here.
    hp = jnp.tanh(
        hp_x + jnp.dot(h, w_ref[R_MZ:R_MZ + HIDDEN, :], preferred_element_type=f32))
    hp = jnp.tanh(
        jnp.dot(hp, w_ref[R_PW2:R_PW2 + HIDDEN, :], preferred_element_type=f32)
        + b_ref[ROWS:2 * ROWS, :])
    # action head (pre-bias): cols 16:20 = action_mean, rest 0
    am = jnp.dot(hp, w_ref[R_PAM:R_PAM + HIDDEN, :], preferred_element_type=f32)

    # ---- single fused epilogue: both head biases live in one disjoint-column row ----
    # out = [mu(8) | logvar(8) | action_mean(4) | zeros(12)]
    out_ref[...] = head + am + b_ref[2 * ROWS:3 * ROWS, :]


def vae_forward(x, c, g, packed):
    """Mirrors VAE.forward(..., only_goal_policy=False) in eval mode.

    Returns ((decoder_output_1, decoder_output_2, mu, logvar), c_updated).
    """
    del g  # unused in the implemented branch (use_separate_goal_policy=False)

    batch = x.shape[0]
    assert batch % ROWS == 0
    grid = (batch // ROWS,)

    # Pre-pack x || c || 1 || 0-pad on the wrapper (one cheap XLA concat) so the kernel
    # needs no in-kernel concatenate and layer-1 biases ride the matmul.
    ones = jnp.ones((batch, 1), jnp.float32)
    pad = jnp.zeros((batch, XIN_W - (DX + DC + 1)), jnp.float32)
    xin = jnp.concatenate([x, c, ones, pad], axis=1)

    out = pl.pallas_call(
        vae_fused_kernel,
        out_shape=jax.ShapeDtypeStruct((batch, OUT_W), jnp.float32),
        grid=grid,
        in_specs=[
            pl.BlockSpec((ROWS, XIN_W), lambda i: (i, 0)),
            # weights / biases: constant block index -> stay VMEM-resident across steps
            pl.BlockSpec((W_ROWS, W_COLS), lambda i: (0, 0)),
            pl.BlockSpec((B_ROWS, W_COLS), lambda i: (0, 0)),
        ],
        out_specs=pl.BlockSpec((ROWS, OUT_W), lambda i: (i, 0)),
        compiler_params=pltpu.CompilerParams(
            dimension_semantics=("arbitrary",)),
    )(xin, packed["w"], packed["b"])

    mu = out[:, COL_MU:COL_MU + LATENT]
    logvar = out[:, COL_LV:COL_LV + LATENT]
    action_mean = out[:, COL_AM:COL_AM + ACTION_OUT]
    # c[:, -L:] = z (= mu in eval); mu is written once by the kernel, reassembled here.
    c_updated = jnp.concatenate([c[:, :DC - LATENT], mu], axis=1)

    decoder_output_1 = action_mean
    decoder_output_2 = None
    return (decoder_output_1, decoder_output_2, mu, logvar), c_updated


# ---------------------------------------------------------------------------
# Deterministic parameter init (PyTorch nn.Linear-style uniform(+-1/sqrt(fan_in)))
# ---------------------------------------------------------------------------
def _linear(key, fan_in, fan_out):
    kw, kb = jax.random.split(key)
    bound = 1.0 / jnp.sqrt(jnp.float32(fan_in))
    w = jax.random.uniform(kw, (fan_in, fan_out), jnp.float32, -bound, bound)
    b = jax.random.uniform(kb, (1, fan_out), jnp.float32, -bound, bound)
    return w, b


def init_params(key):
    keys = jax.random.split(key, 7)
    # Posterior: Linear(DX+DC, H) -> Linear(H, H) -> {Linear(H, L) mu, Linear(H, L) logvar}
    q_w1, q_b1 = _linear(keys[0], DX + DC, HIDDEN)
    q_w2, q_b2 = _linear(keys[1], HIDDEN, HIDDEN)
    q_wmu, q_bmu = _linear(keys[2], HIDDEN, LATENT)
    q_wlv, q_blv = _linear(keys[3], HIDDEN, LATENT)
    # Policy: Linear(DX+L, H) -> Linear(H, H) -> Linear(H, A)
    p_w1, p_b1 = _linear(keys[4], DX + LATENT, HIDDEN)
    p_w2, p_b2 = _linear(keys[5], HIDDEN, HIDDEN)
    p_wam, p_bam = _linear(keys[6], HIDDEN, ACTION_OUT)
    return dict(
        q_w1=q_w1, q_b1=q_b1, q_w2=q_w2, q_b2=q_b2,
        q_wmu=q_wmu, q_bmu=q_bmu, q_wlv=q_wlv, q_blv=q_blv,
        p_w1=p_w1, p_b1=p_b1, p_w2=p_w2, p_b2=p_b2,
        p_wam=p_wam, p_bam=p_bam,
    )


def pack_params(p):
    """Pack the 14 per-layer tensors into one weight slab + one bias slab (host, one-time).

    Layer-1 biases are placed on the constant-1 row of their weight blocks; the policy
    layer-1 z-half is pre-composed through the (linear, eval-mode) mu head:
        W_mz = W_mu @ W_p1z,   b_mz = b_mu @ W_p1z  (folded into the PX1 bias row).
    """
    p_w1_x = p["p_w1"][:DX, :]
    p_w1_z = p["p_w1"][DX:, :]

    w = jnp.zeros((W_ROWS, W_COLS), jnp.float32)
    # posterior L1 (+ bias row fed by the constant-1 column of xin)
    w = w.at[R_QW1:R_QW1 + DX + DC, :].set(p["q_w1"])
    w = w.at[R_QW1 + XIN_BIAS_COL, :].set(p["q_b1"][0])
    # policy L1, x half; c rows stay zero; bias row = p_b1 + b_mu @ W_p1z
    w = w.at[R_PX1:R_PX1 + DX, :].set(p_w1_x)
    w = w.at[R_PX1 + XIN_BIAS_COL, :].set(p["p_b1"][0] + p["q_bmu"][0] @ p_w1_z)
    # posterior L2
    w = w.at[R_QW2:R_QW2 + HIDDEN, :].set(p["q_w2"])
    # posterior head: mu -> cols 0:8, logvar -> cols 8:16
    w = w.at[R_QHEAD:R_QHEAD + HIDDEN, COL_MU:COL_MU + LATENT].set(p["q_wmu"])
    w = w.at[R_QHEAD:R_QHEAD + HIDDEN, COL_LV:COL_LV + LATENT].set(p["q_wlv"])
    # composed z path: h -> policy L1 pre-activation
    w = w.at[R_MZ:R_MZ + HIDDEN, :].set(p["q_wmu"] @ p_w1_z)
    # policy L2
    w = w.at[R_PW2:R_PW2 + HIDDEN, :].set(p["p_w2"])
    # policy action head -> cols 16:20
    w = w.at[R_PAM:R_PAM + HIDDEN, COL_AM:COL_AM + ACTION_OUT].set(p["p_wam"])

    # pre-broadcast bias slab (plain aligned loads in-kernel, no sublane broadcast)
    heads = jnp.zeros((W_COLS,), jnp.float32)
    heads = heads.at[COL_MU:COL_MU + LATENT].set(p["q_bmu"][0])
    heads = heads.at[COL_LV:COL_LV + LATENT].set(p["q_blv"][0])
    heads = heads.at[COL_AM:COL_AM + ACTION_OUT].set(p["p_bam"][0])

    b = jnp.zeros((B_ROWS, W_COLS), jnp.float32)
    b = b.at[0 * ROWS:1 * ROWS, :].set(jnp.broadcast_to(p["q_b2"], (ROWS, W_COLS)))
    b = b.at[1 * ROWS:2 * ROWS, :].set(jnp.broadcast_to(p["p_b2"], (ROWS, W_COLS)))
    b = b.at[2 * ROWS:3 * ROWS, :].set(jnp.broadcast_to(heads, (ROWS, W_COLS)))
    return {"w": w, "b": b}


# ---------------------------------------------------------------------------
# Pure-JAX reference (mirrors the PyTorch module, eval mode)
# ---------------------------------------------------------------------------
def vae_reference(x, c, params):
    xc = jnp.concatenate([x, c], axis=1)
    h = jnp.tanh(xc @ params["q_w1"] + params["q_b1"])
    h = jnp.tanh(h @ params["q_w2"] + params["q_b2"])
    mu = h @ params["q_wmu"] + params["q_bmu"]
    lv = h @ params["q_wlv"] + params["q_blv"]
    c_upd = c.at[:, DC - LATENT:].set(mu)
    xz = jnp.concatenate([x[:, -STATE:], c_upd[:, -LATENT:]], axis=1)
    hp = jnp.tanh(xz @ params["p_w1"] + params["p_b1"])
    hp = jnp.tanh(hp @ params["p_w2"] + params["p_b2"])
    am = hp @ params["p_wam"] + params["p_bam"]
    return am, mu, lv, c_upd


if __name__ == "__main__":
    key = jax.random.PRNGKey(0)
    kx, kc, kg, kp = jax.random.split(key, 4)

    x = jax.random.normal(kx, (BATCH, DX), jnp.float32)
    c = jax.random.normal(kc, (BATCH, DC), jnp.float32)
    g = jax.random.normal(kg, (BATCH, GOAL), jnp.float32)

    params = init_params(kp)
    packed = pack_params(params)   # built once on the host; reused across calls

    (dec1, dec2, mu, logvar), c_updated = vae_forward(x, c, g, packed)
    jax.block_until_ready((dec1, mu, logvar, c_updated))

    # correctness check against pure-JAX reference
    ref_am, ref_mu, ref_lv, ref_c = vae_reference(x, c, params)
    assert jnp.allclose(dec1, ref_am, atol=2e-5), "action_mean mismatch"
    assert jnp.allclose(mu, ref_mu, atol=1e-5), "mu mismatch"
    assert jnp.allclose(logvar, ref_lv, atol=1e-5), "logvar mismatch"
    assert jnp.allclose(c_updated, ref_c, atol=1e-5), "c update mismatch"
    assert dec2 is None

    print("KERNEL_OK")
</pallas_src>

<mosaic_0001>
module attributes {stable_mosaic.version = 11 : i64} {
  func.func @vae_fused_kernel(%arg0: i32, %arg1: memref<16x24xf32, #tpu.memory_space<vmem>>, %arg2: memref<208x32xf32, #tpu.memory_space<vmem>>, %arg3: memref<48x32xf32, #tpu.memory_space<vmem>>, %arg4: memref<16x32xf32, #tpu.memory_space<vmem>>) attributes {dimension_semantics = [#tpu.dimension_semantics<arbitrary>], iteration_bounds = array<i64: 1>, scalar_prefetch = 0 : i64, scratch_operands = 0 : i64, tpu.core_type = #tpu.core_type<tc>, window_params = [{transform_indices = @transform_0, window_bounds = array<i64: 16, 24>}, {pipeline_mode = #tpu.pipeline_mode<synchronous>, transform_indices = @transform_1, window_bounds = array<i64: 208, 32>}, {pipeline_mode = #tpu.pipeline_mode<synchronous>, transform_indices = @transform_2, window_bounds = array<i64: 48, 32>}, {transform_indices = @transform_3, window_bounds = array<i64: 16, 32>}]} {
    %c0 = arith.constant 0 : index
    %c0_0 = arith.constant 0 : index
    %0 = vector.load %arg1[%c0, %c0_0] : memref<16x24xf32, #tpu.memory_space<vmem>>, vector<16x24xf32>
    %c24 = arith.constant 24 : index
    %c0_1 = arith.constant 0 : index
    %1 = vector.load %arg2[%c24, %c0_1] : memref<208x32xf32, #tpu.memory_space<vmem>>, vector<24x32xf32>
    %cst = arith.constant dense<0.000000e+00> : vector<16x32xf32>
    %2 = tpu.matmul %0, %1, %cst {dimension_numbers = #tpu.dot_dimension_numbers<[1], [0], [0], [1], [0, 0, 1, 1], [], []>} : vector<16x24xf32>, vector<24x32xf32>, vector<16x32xf32> -> vector<16x32xf32>
    %c0_2 = arith.constant 0 : index
    %c0_3 = arith.constant 0 : index
    %3 = vector.load %arg2[%c0_2, %c0_3] : memref<208x32xf32, #tpu.memory_space<vmem>>, vector<24x32xf32>
    %cst_4 = arith.constant dense<0.000000e+00> : vector<16x32xf32>
    %4 = tpu.matmul %0, %3, %cst_4 {dimension_numbers = #tpu.dot_dimension_numbers<[1], [0], [0], [1], [0, 0, 1, 1], [], []>} : vector<16x24xf32>, vector<24x32xf32>, vector<16x32xf32> -> vector<16x32xf32>
    %5 = math.tanh %4 : vector<16x32xf32>
    %c48 = arith.constant 48 : index
    %c0_5 = arith.constant 0 : index
    %6 = vector.load %arg2[%c48, %c0_5] : memref<208x32xf32, #tpu.memory_space<vmem>>, vector<32x32xf32>
    %cst_6 = arith.constant dense<0.000000e+00> : vector<16x32xf32>
    %7 = tpu.matmul %5, %6, %cst_6 {dimension_numbers = #tpu.dot_dimension_numbers<[1], [0], [0], [1], [0, 0, 1, 1], [], []>} : vector<16x32xf32>, vector<32x32xf32>, vector<16x32xf32> -> vector<16x32xf32>
    %c0_7 = arith.constant 0 : index
    %c0_8 = arith.constant 0 : index
    %8 = vector.load %arg3[%c0_7, %c0_8] : memref<48x32xf32, #tpu.memory_space<vmem>>, vector<16x32xf32>
    %9 = arith.addf %7, %8 : vector<16x32xf32>
    %10 = math.tanh %9 : vector<16x32xf32>
    %c80 = arith.constant 80 : index
    %c0_9 = arith.constant 0 : index
    %11 = vector.load %arg2[%c80, %c0_9] : memref<208x32xf32, #tpu.memory_space<vmem>>, vector<32x32xf32>
    %cst_10 = arith.constant dense<0.000000e+00> : vector<16x32xf32>
    %12 = tpu.matmul %10, %11, %cst_10 {dimension_numbers = #tpu.dot_dimension_numbers<[1], [0], [0], [1], [0, 0, 1, 1], [], []>} : vector<16x32xf32>, vector<32x32xf32>, vector<16x32xf32> -> vector<16x32xf32>
    %c112 = arith.constant 112 : index
    %c0_11 = arith.constant 0 : index
    %13 = vector.load %arg2[%c112, %c0_11] : memref<208x32xf32, #tpu.memory_space<vmem>>, vector<32x32xf32>
    %cst_12 = arith.constant dense<0.000000e+00> : vector<16x32xf32>
    %14 = tpu.matmul %10, %13, %cst_12 {dimension_numbers = #tpu.dot_dimension_numbers<[1], [0], [0], [1], [0, 0, 1, 1], [], []>} : vector<16x32xf32>, vector<32x32xf32>, vector<16x32xf32> -> vector<16x32xf32>
    %15 = arith.addf %2, %14 : vector<16x32xf32>
    %16 = math.tanh %15 : vector<16x32xf32>
    %c144 = arith.constant 144 : index
    %c0_13 = arith.constant 0 : index
    %17 = vector.load %arg2[%c144, %c0_13] : memref<208x32xf32, #tpu.memory_space<vmem>>, vector<32x32xf32>
    %cst_14 = arith.constant dense<0.000000e+00> : vector<16x32xf32>
    %18 = tpu.matmul %16, %17, %cst_14 {dimension_numbers = #tpu.dot_dimension_numbers<[1], [0], [0], [1], [0, 0, 1, 1], [], []>} : vector<16x32xf32>, vector<32x32xf32>, vector<16x32xf32> -> vector<16x32xf32>
    %c16 = arith.constant 16 : index
    %c0_15 = arith.constant 0 : index
    %19 = vector.load %arg3[%c16, %c0_15] : memref<48x32xf32, #tpu.memory_space<vmem>>, vector<16x32xf32>
    %20 = arith.addf %18, %19 : vector<16x32xf32>
    %21 = math.tanh %20 : vector<16x32xf32>
    %c176 = arith.constant 176 : index
    %c0_16 = arith.constant 0 : index
    %22 = vector.load %arg2[%c176, %c0_16] : memref<208x32xf32, #tpu.memory_space<vmem>>, vector<32x32xf32>
    %cst_17 = arith.constant dense<0.000000e+00> : vector<16x32xf32>
    %23 = tpu.matmul %21, %22, %cst_17 {dimension_numbers = #tpu.dot_dimension_numbers<[1], [0], [0], [1], [0, 0, 1, 1], [], []>} : vector<16x32xf32>, vector<32x32xf32>, vector<16x32xf32> -> vector<16x32xf32>
    %24 = arith.addf %12, %23 : vector<16x32xf32>
    %c32 = arith.constant 32 : index
    %c0_18 = arith.constant 0 : index
    %25 = vector.load %arg3[%c32, %c0_18] : memref<48x32xf32, #tpu.memory_space<vmem>>, vector<16x32xf32>
    %26 = arith.addf %24, %25 : vector<16x32xf32>
    %c0_19 = arith.constant 0 : index
    %c0_20 = arith.constant 0 : index
    %27 = vector.load %arg4[%c0_19, %c0_20] : memref<16x32xf32, #tpu.memory_space<vmem>>, vector<16x32xf32>
    tpu.vector_store %arg4[%c0_19, %c0_20], %26 {strides = array<i32>} : memref<16x32xf32, #tpu.memory_space<vmem>>, vector<16x32xf32>,
    return
  }
  func.func @transform_0(%arg0: i32) -> (i32, i32) {
    %c0_i32 = arith.constant 0 : i32
    %c0_i32_0 = arith.constant 0 : i32
    return %arg0, %c0_i32 : i32, i32
  }
  func.func @transform_1(%arg0: i32) -> (i32, i32) {
    %c0_i32 = arith.constant 0 : i32
    %c0_i32_0 = arith.constant 0 : i32
    %c0_i32_1 = arith.constant 0 : i32
    return %c0_i32, %c0_i32_0 : i32, i32
  }
  func.func @transform_2(%arg0: i32) -> (i32, i32) {
    %c0_i32 = arith.constant 0 : i32
    %c0_i32_0 = arith.constant 0 : i32
    %c0_i32_1 = arith.constant 0 : i32
    return %c0_i32, %c0_i32_0 : i32, i32
  }
  func.func @transform_3(%arg0: i32) -> (i32, i32) {
    %c0_i32 = arith.constant 0 : i32
    %c0_i32_0 = arith.constant 0 : i32
    return %arg0, %c0_i32 : i32, i32
  }
}

</mosaic_0001>

<llo_original>
// kernel: tpu_custom_call.1
$region0: #{tpu_custom_call.1}
  #allocation0 [shape = 'u32[]', space=smem, size = 0x4, offset = 0x4, fixed_abs, tag = 'smem constant byte address 0x4 - core index']
  #allocation1 [shape = 'u32[72,128]{1,0:T(1,128)}', space=vmem, size = 0x9000, scoped, tag = 'internal scratch']
  %s0 = inlined_call_operand.vmem [shape: f32[16,24], index: 0, kind: input, shape index: {}]
  %s1 = inlined_call_operand.vmem [shape: f32[208,32], index: 1, kind: input, shape index: {}]
  %s2 = inlined_call_operand.vmem [shape: f32[48,32], index: 2, kind: input, shape index: {}]
  %s3 = inlined_call_operand.hbm [shape: f32[16,32], index: 3, kind: output, shape index: {}]
  %s4 = sld [smem:[#allocation0]]
  $region22: #{tpu_custom_call.1} parent=0
    _
  %s6 = ssub.s32 1, %s4
  %s7 = scalar_select 0, %s6, %s4
  $region1: #{tpu_custom_call.1} parent=0
    #allocation2 [shape = 'u8[8192]{0}', space=vmem, size = 0x2000, scoped, tag = 'output window, operand 0, single buffered']
    #allocation3 [shape = 's32[1]{0}', space=sflag, size = 0x4, scoped, tag = 'scoped memory for tpu_custom_call.1']
    %8 = vsyncpa [#allocation3], 0
    // Predicated region
    $region2: #{tpu_custom_call.1} parent=1 // pred_check
      _
    $region3: #{tpu_custom_call.1} parent=1 // pred_check_branch
      %10 = sbr.rel (0) target = $region5
    $region4: #{tpu_custom_call.1} parent=1 // pred_region
      _
    $region5: #{tpu_custom_call.1} parent=1 // pred_fallthru
      _
    // Predicated region
    $region6: #{tpu_custom_call.1} parent=1 // pred_check
      _
    $region7: #{tpu_custom_call.1} parent=1 // pred_check_branch
      %12 = sbr.rel (0) target = $region9
    $region8: #{tpu_custom_call.1} parent=1 // pred_region
      _
    $region9: #{tpu_custom_call.1} parent=1 // pred_fallthru
      _
    // Predicated region
    $region10: #{tpu_custom_call.1} parent=1 // pred_check
      _
    $region11: #{tpu_custom_call.1} parent=1 // pred_check_branch
      %14 = sbr.rel (0) target = $region13
    $region12: #{tpu_custom_call.1} parent=1 // pred_region
      _
    $region13: #{tpu_custom_call.1} parent=1 // pred_fallthru
      _
    %v15 = vld [vmem:[%s0] sm:$0xff]
    %v16 = vld [vmem:[%s0 + $0x8] sm:$0xff]
    %v17 = vld [vmem:[%s1 + $0x18] sm:$0xff]
    %v18 = vld [vmem:[%s1 + $0x20] sm:$0xff]
    %v19 = vld [vmem:[%s1 + $0x28] sm:$0xff]
    %v20 = vld [vmem:[%s1] sm:$0xff]
    %v21 = vld [vmem:[%s1 + $0x8] sm:$0xff]
    %v22 = vld [vmem:[%s1 + $0x10] sm:$0xff]
    %vm23 = vcmask 195584
    %v25 = vsel %vm23, %v15, 0
    %v28 = vsel %vm23, %v16, 0
    %30 = vmatpush.msra.mxu0 0.0
    %31 = vmatpush.msra.mxu0 0.0
    %32 = vmatpush.msra.mxu0 0.0
    %33 = vmatpush.msra.mxu0 0.0
    %34 = vmatpush.msra.mxu0 0.0
    %35 = vmatpush.msra.mxu0 0.0
    %36 = vmatpush.msra.mxu0 0.0
    %37 = vmatpush.msra.mxu0 0.0
    %38 = vmatpush.msra.mxu0 0.0
    %39 = vmatpush.msra.mxu0 0.0
    %40 = vmatpush.msra.mxu0 0.0
    %41 = vmatpush.msra.mxu0 0.0
    %42 = vmatpush.msra.mxu0 0.0
    %43 = vmatpush.msra.mxu0 %v22
    %44 = vmatpush.msra.mxu0 %v21
    %45 = vmatpush.msra.mxu0 %v20
    %46 = vmatmul.f32.gmra.mxu0 %v25
    %v47 = vpop.f32.mrf.mxu0
    %v48 = vadd.f32 0.0, %v47
    %49 = vmatmul.f32.gmra.mxu0 %v28
    %v50 = vpop.f32.mrf.mxu0
    %v51 = vadd.f32 0.0, %v50
    %52 = vdwg.mxu0
    %v53 = vtanh.pop %v48
    %v54 = vtanh.pop %v51
    %v55 = vld [vmem:[%s1 + $0x30] sm:$0xff]
    %v56 = vld [vmem:[%s1 + $0x38] sm:$0xff]
    %v57 = vld [vmem:[%s1 + $0x40] sm:$0xff]
    %v58 = vld [vmem:[%s1 + $0x48] sm:$0xff]
    %v59 = vld [vmem:[%s2] sm:$0xff]
    %v60 = vld [vmem:[%s2 + $0x8] sm:$0xff]
    %vm61 = vcmask 261120
    %v63 = vsel %vm61, %v53, 0
    %v66 = vsel %vm61, %v54, 0
    %68 = vmatpush.msra.mxu0 0.0
    %69 = vmatpush.msra.mxu0 0.0
    %70 = vmatpush.msra.mxu0 0.0
    %71 = vmatpush.msra.mxu0 0.0
    %72 = vmatpush.msra.mxu0 0.0
    %73 = vmatpush.msra.mxu0 0.0
    %74 = vmatpush.msra.mxu0 0.0
    %75 = vmatpush.msra.mxu0 0.0
    %76 = vmatpush.msra.mxu0 0.0
    %77 = vmatpush.msra.mxu0 0.0
    %78 = vmatpush.msra.mxu0 0.0
    %79 = vmatpush.msra.mxu0 0.0
    %80 = vmatpush.msra.mxu0 %v58
    %81 = vmatpush.msra.mxu0 %v57
    %82 = vmatpush.msra.mxu0 %v56
    %83 = vmatpush.msra.mxu0 %v55
    %84 = vmatmul.f32.gmra.mxu0 %v63
    %v85 = vpop.f32.mrf.mxu0
    %v86 = vadd.f32 %v59, %v85
    %87 = vmatmul.f32.gmra.mxu0 %v66
    %v88 = vpop.f32.mrf.mxu0
    %v89 = vadd.f32 %v60, %v88
    %90 = vdwg.mxu0
    %v91 = vtanh.pop %v86
    %v92 = vtanh.pop %v89
    %v93 = vld [vmem:[%s1 + $0x50] sm:$0xff]
    %v94 = vld [vmem:[%s1 + $0x58] sm:$0xff]
    %v95 = vld [vmem:[%s1 + $0x60] sm:$0xff]
    %v96 = vld [vmem:[%s1 + $0x68] sm:$0xff]
    %v97 = vld [vmem:[%s1 + $0x70] sm:$0xff]
    %v98 = vld [vmem:[%s1 + $0x78] sm:$0xff]
    %v99 = vld [vmem:[%s1 + $0x80] sm:$0xff]
    %v100 = vld [vmem:[%s1 + $0x88] sm:$0xff]
    %v102 = vsel %vm61, %v91, 0
    %v105 = vsel %vm61, %v92, 0
    %107 = vmatpush.msra.mxu0 0.0
    %108 = vmatpush.msra.mxu0 0.0
    %109 = vmatpush.msra.mxu0 0.0
    %110 = vmatpush.msra.mxu0 0.0
    %111 = vmatpush.msra.mxu0 0.0
    %112 = vmatpush.msra.mxu0 0.0
    %113 = vmatpush.msra.mxu0 0.0
    %114 = vmatpush.msra.mxu0 0.0
    %115 = vmatpush.msra.mxu0 0.0
    %116 = vmatpush.msra.mxu0 0.0
    %117 = vmatpush.msra.mxu0 0.0
    %118 = vmatpush.msra.mxu0 0.0
    %119 = vmatpush.msra.mxu0 %v100
    %120 = vmatpush.msra.mxu0 %v99
    %121 = vmatpush.msra.mxu0 %v98
    %122 = vmatpush.msra.mxu0 %v97
    %123 = vmatmul.f32.gmra.mxu0 %v102
    %v124 = vpop.f32.mrf.mxu0
    %v125 = vadd.f32 0.0, %v124
    %126 = vmatmul.f32.gmra.mxu0 %v105
    %v127 = vpop.f32.mrf.mxu0
    %v128 = vadd.f32 0.0, %v127
    %129 = vdwg.mxu0
    %130 = vmatpush.msra.mxu0 0.0
    %131 = vmatpush.msra.mxu0 0.0
    %132 = vmatpush.msra.mxu0 0.0
    %133 = vmatpush.msra.mxu0 0.0
    %134 = vmatpush.msra.mxu0 0.0
    %135 = vmatpush.msra.mxu0 0.0
    %136 = vmatpush.msra.mxu0 0.0
    %137 = vmatpush.msra.mxu0 0.0
    %138 = vmatpush.msra.mxu0 0.0
    %139 = vmatpush.msra.mxu0 0.0
    %140 = vmatpush.msra.mxu0 0.0
    %141 = vmatpush.msra.mxu0 0.0
    %142 = vmatpush.msra.mxu0 0.0
    %143 = vmatpush.msra.mxu0 %v19
    %144 = vmatpush.msra.mxu0 %v18
    %145 = vmatpush.msra.mxu0 %v17
    %146 = vmatmul.f32.gmra.mxu0 %v25
    %v147 = vpop.f32.mrf.mxu0
    %v148 = vadd.f32 %v125, %v147
    %149 = vmatmul.f32.gmra.mxu0 %v28
    %v150 = vpop.f32.mrf.mxu0
    %v151 = vadd.f32 %v128, %v150
    %152 = vdwg.mxu0
    %v153 = vtanh.pop %v148
    %v154 = vtanh.pop %v151
    %v155 = vld [vmem:[%s1 + $0x90] sm:$0xff]
    %v156 = vld [vmem:[%s1 + $0x98] sm:$0xff]
    %v157 = vld [vmem:[%s1 + $0xa0] sm:$0xff]
    %v158 = vld [vmem:[%s1 + $0xa8] sm:$0xff]
    %v159 = vld [vmem:[%s2 + $0x10] sm:$0xff]
    %v160 = vld [vmem:[%s2 + $0x18] sm:$0xff]
    %v162 = vsel %vm61, %v153, 0
    %v165 = vsel %vm61, %v154, 0
    %167 = vmatpush.msra.mxu0 0.0
    %168 = vmatpush.msra.mxu0 0.0
    %169 = vmatpush.msra.mxu0 0.0
    %170 = vmatpush.msra.mxu0 0.0
    %171 = vmatpush.msra.mxu0 0.0
    %172 = vmatpush.msra.mxu0 0.0
    %173 = vmatpush.msra.mxu0 0.0
    %174 = vmatpush.msra.mxu0 0.0
    %175 = vmatpush.msra.mxu0 0.0
    %176 = vmatpush.msra.mxu0 0.0
    %177 = vmatpush.msra.mxu0 0.0
    %178 = vmatpush.msra.mxu0 0.0
    %179 = vmatpush.msra.mxu0 %v158
    %180 = vmatpush.msra.mxu0 %v157
    %181 = vmatpush.msra.mxu0 %v156
    %182 = vmatpush.msra.mxu0 %v155
    %183 = vmatmul.f32.gmra.mxu0 %v162
    %v184 = vpop.f32.mrf.mxu0
    %v185 = vadd.f32 %v159, %v184
    %186 = vmatmul.f32.gmra.mxu0 %v165
    %v187 = vpop.f32.mrf.mxu0
    %v188 = vadd.f32 %v160, %v187
    %189 = vdwg.mxu0
    %v190 = vtanh.pop %v185
    %v191 = vtanh.pop %v188
    %v192 = vld [vmem:[%s1 + $0xb0] sm:$0xff]
    %v193 = vld [vmem:[%s1 + $0xb8] sm:$0xff]
    %v194 = vld [vmem:[%s1 + $0xc0] sm:$0xff]
    %v195 = vld [vmem:[%s1 + $0xc8] sm:$0xff]
    %v197 = vsel %vm61, %v190, 0
    %v200 = vsel %vm61, %v191, 0
    %202 = vmatpush.msra.mxu0 0.0
    %203 = vmatpush.msra.mxu0 0.0
    %204 = vmatpush.msra.mxu0 0.0
    %205 = vmatpush.msra.mxu0 0.0
    %206 = vmatpush.msra.mxu0 0.0
    %207 = vmatpush.msra.mxu0 0.0
    %208 = vmatpush.msra.mxu0 0.0
    %209 = vmatpush.msra.mxu0 0.0
    %210 = vmatpush.msra.mxu0 0.0
    %211 = vmatpush.msra.mxu0 0.0
    %212 = vmatpush.msra.mxu0 0.0
    %213 = vmatpush.msra.mxu0 0.0
    %214 = vmatpush.msra.mxu0 %v195
    %215 = vmatpush.msra.mxu0 %v194
    %216 = vmatpush.msra.mxu0 %v193
    %217 = vmatpush.msra.mxu0 %v192
    %218 = vmatmul.f32.gmra.mxu0 %v197
    %v219 = vpop.f32.mrf.mxu0
    %v220 = vadd.f32 0.0, %v219
    %221 = vmatmul.f32.gmra.mxu0 %v200
    %v222 = vpop.f32.mrf.mxu0
    %v223 = vadd.f32 0.0, %v222
    %224 = vdwg.mxu0
    %225 = vmatpush.msra.mxu0 0.0
    %226 = vmatpush.msra.mxu0 0.0
    %227 = vmatpush.msra.mxu0 0.0
    %228 = vmatpush.msra.mxu0 0.0
    %229 = vmatpush.msra.mxu0 0.0
    %230 = vmatpush.msra.mxu0 0.0
    %231 = vmatpush.msra.mxu0 0.0
    %232 = vmatpush.msra.mxu0 0.0
    %233 = vmatpush.msra.mxu0 0.0
    %234 = vmatpush.msra.mxu0 0.0
    %235 = vmatpush.msra.mxu0 0.0
    %236 = vmatpush.msra.mxu0 0.0
    %237 = vmatpush.msra.mxu0 %v96
    %238 = vmatpush.msra.mxu0 %v95
    %239 = vmatpush.msra.mxu0 %v94
    %240 = vmatpush.msra.mxu0 %v93
    %241 = vmatmul.f32.gmra.mxu0 %v102
    %v242 = vpop.f32.mrf.mxu0
    %v243 = vadd.f32 %v220, %v242
    %244 = vmatmul.f32.gmra.mxu0 %v105
    %v245 = vpop.f32.mrf.mxu0
    %v246 = vadd.f32 %v223, %v245
    %247 = vdwg.mxu0
    %v248 = vld [vmem:[%s2 + $0x20] sm:$0xff]
    %v249 = vld [vmem:[%s2 + $0x28] sm:$0xff]
    %v250 = vadd.f32 %v243, %v248
    %v251 = vadd.f32 %v246, %v249
    %252 = vst.msk [vmem:[#allocation2] sm:$0xff] %vm61, %v250
    %253 = vst.msk [vmem:[#allocation2 + $0x8] sm:$0xff] %vm61, %v251
    // Predicated region
    $region14: #{tpu_custom_call.1} parent=1 // pred_check
      _
    $region15: #{tpu_custom_call.1} parent=1 // pred_check_branch
      %255 = sbr.rel (0) target = $region17
    $region16: #{tpu_custom_call.1} parent=1 // pred_region
      %257 = vsyncadd [#allocation3], 0
      %s258 = sshll.u32 [#allocation2], 4
      %s259 = int_to_ptr.vmem [resolvable:$true] %s258
      %s260 = sshll.u32 %s3, 4
      %s261 = int_to_ptr.hbm [resolvable:$true] %s260
      %266 = dma.vmem_to_hbm [thread:$0]  %s259, 256, %s261, [#allocation3], 128, 128, 8
    $region17: #{tpu_custom_call.1} parent=1 // pred_fallthru
      _
    // Predicated region
    $region18: #{tpu_custom_call.1} parent=1 // pred_check
      _
    $region19: #{tpu_custom_call.1} parent=1 // pred_check_branch
      %268 = sbr.rel (0) target = $region21
    $region20: #{tpu_custom_call.1} parent=1 // pred_region
      %270 = dma.done [#allocation3], 256
    $region21: #{tpu_custom_call.1} parent=1 // pred_fallthru
      _
    %271 = vsyncpa [#allocation3], 1

</llo_original>
